<compile_context>
chip_gen: v5e
topology: v5e:2x2
jax: 0.10.0
libtpu: 0.0.40
codegen_flags: <defaults>
</compile_context>

<pallas_src>
import functools

import jax
import jax.numpy as jnp
import numpy as np
from jax.experimental import pallas as pl
from jax.experimental.pallas import tpu as pltpu


def _round_up(x, m):
    return (x + m - 1) // m * m


def _cdiv(a, b):
    return -(-a // b)


# ----------------------------------------------------------------------------
# Pallas kernel: encoder MLP -> fused mu|log_var head -> reparameterize ->
# decoder MLP.  All matmuls run bf16 x bf16 -> f32 on the MXU; bias-add / ReLU
# / exp / reparam FMA stay in f32 on the VPU/EUP; activations carried in bf16.
# ----------------------------------------------------------------------------
def _vae_kernel(
    x_ref, eps_ref,
    we0_ref, be0_ref, we1_ref, be1_ref, we2_ref, be2_ref,     # encoder Base
    wh_ref, bh_ref,                                           # fused mu|log_var head
    wd0_ref, bd0_ref, wd1_ref, bd1_ref, wd2_ref, bd2_ref,     # decoder
    wd3_ref, bd3_ref,
    recon_ref, latent_ref,
    *, latent_dim,
):
    def matmul_bias(h_bf16, w_ref, b_ref):
        # bf16 operands on the MXU, f32 accumulation, f32 bias add.
        return jnp.dot(h_bf16, w_ref[...],
                       preferred_element_type=jnp.float32) + b_ref[...]

    def linear_relu(h_bf16, w_ref, b_ref):
        # ReLU in f32, then immediately back to bf16: halves inter-layer
        # activation storage / spill traffic as TB grows.
        return jnp.maximum(matmul_bias(h_bf16, w_ref, b_ref), 0.0
                           ).astype(jnp.bfloat16)

    # ---- encoder Base: D_pad -> 256 -> 128 -> 64 (ReLU after each) ----
    h = x_ref[...]                                   # bf16 activations
    h = linear_relu(h, we0_ref, be0_ref)
    h = linear_relu(h, we1_ref, be1_ref)
    h = linear_relu(h, we2_ref, be2_ref)

    # ---- fused latent heads: one (64, 128) matmul -> [mu | log_var | 0] ----
    heads = matmul_bias(h, wh_ref, bh_ref)           # f32
    latent_ref[...] = heads                          # lane-dense 128-wide store

    mu = heads[:, :latent_dim]
    log_var = heads[:, latent_dim:2 * latent_dim]

    # ---- reparameterize: z = eps * exp(0.5 * log_var) + mu (f32, EUP exp) ----
    z = eps_ref[...].astype(jnp.float32) * jnp.exp(0.5 * log_var) + mu

    # ---- decoder: Linear(latent,64)+ReLU, then Base 64->128->256->D_pad ----
    d = linear_relu(z.astype(jnp.bfloat16), wd0_ref, bd0_ref)
    d = linear_relu(d, wd1_ref, bd1_ref)
    d = linear_relu(d, wd2_ref, bd2_ref)
    recon_ref[...] = matmul_bias(d, wd3_ref, bd3_ref).astype(jnp.bfloat16)


def vae_forward_pallas(x, eps, params, tb=1024):
    """x: (B, state_stack, input_dim); eps: (B, latent_dim);
    params: dict of W_* (in,out) and b_* (1,out) float32 arrays."""
    B = x.shape[0]
    D = x.shape[1] * x.shape[2]
    latent_dim = eps.shape[1]

    D_pad = _round_up(D, 128)                 # lane-dense input/recon width
    lat_pad = max(128, _round_up(2 * latent_dim, 128))

    # ---- batch tile / grid: TB multiple of 8, as large as tb, and >= 2 grid
    # steps whenever the batch permits so v7x's 2 TCs can split the work.
    n_tiles = max(1, _cdiv(B, tb))
    if B > 8:
        n_tiles = max(n_tiles, 2)
    TB = min(tb, _round_up(_cdiv(B, n_tiles), 8))
    B_pad = _round_up(B, TB)
    grid = (B_pad // TB,)

    # ---- activations (glue): flatten, pad batch + feature dims, cast ----
    x_flat = x.reshape(B, D).astype(jnp.bfloat16)
    x_flat = jnp.pad(x_flat, ((0, B_pad - B), (0, D_pad - D)))
    eps_p = jnp.pad(eps.astype(jnp.bfloat16), ((0, B_pad - B), (0, 0)))

    # ---- parameters (glue): pad e0/d3 to D_pad, fuse mu|log_var head ----
    W_e0 = jnp.pad(params["W_e0"], ((0, D_pad - D), (0, 0)))
    W_h = jnp.pad(jnp.concatenate([params["W_mu"], params["W_lv"]], axis=1),
                  ((0, 0), (0, lat_pad - 2 * latent_dim)))
    b_h = jnp.pad(jnp.concatenate([params["b_mu"], params["b_lv"]], axis=1),
                  ((0, 0), (0, lat_pad - 2 * latent_dim)))
    W_d3 = jnp.pad(params["W_d3"], ((0, 0), (0, D_pad - D)))
    b_d3 = jnp.pad(params["b_d3"], ((0, 0), (0, D_pad - D)))

    raw = [
        W_e0, params["b_e0"], params["W_e1"], params["b_e1"],
        params["W_e2"], params["b_e2"], W_h, b_h,
        params["W_d0"], params["b_d0"], params["W_d1"], params["b_d1"],
        params["W_d2"], params["b_d2"], W_d3, b_d3,
    ]
    # weight matrices (even slots) -> bf16; biases stay f32.
    flat_params = [p.astype(jnp.bfloat16) if i % 2 == 0 else p.astype(jnp.float32)
                   for i, p in enumerate(raw)]

    # ---- BlockSpecs ----
    def batch_spec(feat):
        return pl.BlockSpec((TB, feat), lambda i: (i, 0))

    def resident_spec(shape):
        # constant block index -> DMA'd once, stays VMEM-resident across tiles
        return pl.BlockSpec(shape, lambda i: (0, 0))

    in_specs = [batch_spec(D_pad), batch_spec(latent_dim)]
    in_specs += [resident_spec(p.shape) for p in flat_params]

    out_shapes = (
        jax.ShapeDtypeStruct((B_pad, D_pad), jnp.bfloat16),   # recon slab (bf16)
        jax.ShapeDtypeStruct((B_pad, lat_pad), jnp.float32),  # [mu|log_var|pad]
    )
    out_specs = (batch_spec(D_pad), batch_spec(lat_pad))

    # ---- cost estimate (advisory, helps XLA schedule surrounding ops) ----
    mat_flops = sum(int(np.prod(flat_params[i].shape))
                    for i in range(0, len(flat_params), 2))
    param_bytes = sum(int(np.prod(p.shape)) * p.dtype.itemsize for p in flat_params)
    act_bytes = (x_flat.size * 2 + eps_p.size * 2
                 + B_pad * D_pad * 2 + B_pad * lat_pad * 4)
    cost = pl.CostEstimate(
        flops=2 * B_pad * mat_flops,
        transcendentals=B_pad * latent_dim,
        bytes_accessed=int(param_bytes + act_bytes),
    )

    # ---- scoped-VMEM override only if the estimated footprint is large
    # (big TB and/or big D on v5e's 16 MiB default); at demo sizes it's None.
    vmem_est = 2 * (TB * D_pad * 2 + TB * latent_dim * 2     # x, eps streams
                    + TB * D_pad * 2 + TB * lat_pad * 4      # recon, latent slab
                    + param_bytes)                           # resident weights
    vmem_est += 8 * TB * 256 * 4                             # intermediates
    vmem_limit = None
    if vmem_est > 12 * 1024 * 1024:
        vmem_limit = int(min(2 * vmem_est, 60 * 1024 * 1024))

    kernel = functools.partial(_vae_kernel, latent_dim=latent_dim)
    recon_pad, latent_slab = pl.pallas_call(
        kernel,
        out_shape=out_shapes,
        grid=grid,
        in_specs=in_specs,
        out_specs=out_specs,
        compiler_params=pltpu.CompilerParams(
            dimension_semantics=("parallel",),   # batch axis over v7x's 2 TCs
            vmem_limit_bytes=vmem_limit),
        cost_estimate=cost,
    )(x_flat, eps_p, *flat_params)

    # glue: strip padding, upcast recon back to f32, restore PyTorch layout.
    recon = recon_pad[:B, :D].astype(jnp.float32).reshape(x.shape)
    mu = latent_slab[:B, :latent_dim]
    log_var = latent_slab[:B, latent_dim:2 * latent_dim]
    # forward() returns [decode(z), x, mu, log_var]
    return [recon, x, mu, log_var]


# ----------------------------------------------------------------------------
# Deterministic parameter construction (synthetic init, no checkpoint load).
# ----------------------------------------------------------------------------
def make_params(key, state_stack, input_dim, encoder_arc, decoder_arc, latent_dim):
    D = state_stack * input_dim
    layer_dims = {
        "e0": (D, encoder_arc[0]),
        "e1": (encoder_arc[0], encoder_arc[1]),
        "e2": (encoder_arc[1], encoder_arc[2]),
        "mu": (encoder_arc[2], latent_dim),
        "lv": (encoder_arc[2], latent_dim),
        "d0": (latent_dim, decoder_arc[0]),
        "d1": (decoder_arc[0], decoder_arc[1]),
        "d2": (decoder_arc[1], decoder_arc[2]),
        "d3": (decoder_arc[2], D),
    }
    params = {}
    for i, (name, (din, dout)) in enumerate(layer_dims.items()):
        kw, kb = jax.random.split(jax.random.fold_in(key, i))
        bound = 1.0 / np.sqrt(din)  # same scale as PyTorch nn.Linear default init
        params[f"W_{name}"] = jax.random.uniform(
            kw, (din, dout), jnp.float32, minval=-bound, maxval=bound)
        params[f"b_{name}"] = jax.random.uniform(
            kb, (1, dout), jnp.float32, minval=-bound, maxval=bound)
    return params


# ----------------------------------------------------------------------------
# Pure-JAX f32 reference (for correctness check of the kernel).
# ----------------------------------------------------------------------------
def vae_forward_ref(x, eps, params):
    B = x.shape[0]
    h = x.reshape(B, -1).astype(jnp.float32)

    def lin(h, name, relu):
        y = h @ params[f"W_{name}"] + params[f"b_{name}"]
        return jnp.maximum(y, 0.0) if relu else y

    h = lin(h, "e0", True); h = lin(h, "e1", True); h = lin(h, "e2", True)
    mu = lin(h, "mu", False)
    log_var = lin(h, "lv", False)
    z = eps * jnp.exp(0.5 * log_var) + mu
    d = lin(z, "d0", True); d = lin(d, "d1", True); d = lin(d, "d2", True)
    recon = lin(d, "d3", False).reshape(x.shape)
    return [recon, x, mu, log_var]


if __name__ == "__main__":
    # Small, module-consistent shapes.
    B, state_stack, input_dim = 2, 4, 16            # x: (2, 4, 16), D = 64
    encoder_arc, decoder_arc, latent_dim = [256, 128, 64], [64, 128, 256], 32

    root = jax.random.PRNGKey(0)
    k_x, k_eps, k_par = jax.random.split(root, 3)

    x = jax.random.normal(k_x, (B, state_stack, input_dim), jnp.float32)
    # eps plays the role of torch.randn_like(std) in reparameterize()
    eps = jax.random.normal(k_eps, (B, latent_dim), jnp.float32)
    params = make_params(k_par, state_stack, input_dim,
                         encoder_arc, decoder_arc, latent_dim)

    recon, x_out, mu, log_var = vae_forward_pallas(x, eps, params)
    jax.block_until_ready((recon, x_out, mu, log_var))

    # correctness check vs pure-JAX f32 reference (bf16 matmuls/acts -> loose tol)
    recon_r, _, mu_r, lv_r = vae_forward_ref(x, eps, params)
    np.testing.assert_allclose(np.asarray(recon), np.asarray(recon_r),
                               rtol=5e-2, atol=5e-2)
    np.testing.assert_allclose(np.asarray(mu), np.asarray(mu_r),
                               rtol=5e-2, atol=5e-2)
    np.testing.assert_allclose(np.asarray(log_var), np.asarray(lv_r),
                               rtol=5e-2, atol=5e-2)

    print("KERNEL_OK")
</pallas_src>

<mosaic_0001>
module attributes {stable_mosaic.version = 11 : i64} {
  func.func @_vae_kernel(%arg0: i32, %arg1: memref<8x128xbf16, #tpu.memory_space<vmem>>, %arg2: memref<8x32xbf16, #tpu.memory_space<vmem>>, %arg3: memref<128x256xbf16, #tpu.memory_space<vmem>>, %arg4: memref<1x256xf32, #tpu.memory_space<vmem>>, %arg5: memref<256x128xbf16, #tpu.memory_space<vmem>>, %arg6: memref<1x128xf32, #tpu.memory_space<vmem>>, %arg7: memref<128x64xbf16, #tpu.memory_space<vmem>>, %arg8: memref<1x64xf32, #tpu.memory_space<vmem>>, %arg9: memref<64x128xbf16, #tpu.memory_space<vmem>>, %arg10: memref<1x128xf32, #tpu.memory_space<vmem>>, %arg11: memref<32x64xbf16, #tpu.memory_space<vmem>>, %arg12: memref<1x64xf32, #tpu.memory_space<vmem>>, %arg13: memref<64x128xbf16, #tpu.memory_space<vmem>>, %arg14: memref<1x128xf32, #tpu.memory_space<vmem>>, %arg15: memref<128x256xbf16, #tpu.memory_space<vmem>>, %arg16: memref<1x256xf32, #tpu.memory_space<vmem>>, %arg17: memref<256x128xbf16, #tpu.memory_space<vmem>>, %arg18: memref<1x128xf32, #tpu.memory_space<vmem>>, %arg19: memref<8x128xbf16, #tpu.memory_space<vmem>>, %arg20: memref<8x128xf32, #tpu.memory_space<vmem>>) attributes {dimension_semantics = [#tpu.dimension_semantics<parallel>], iteration_bounds = array<i64: 1>, scalar_prefetch = 0 : i64, scratch_operands = 0 : i64, tpu.core_type = #tpu.core_type<tc>, window_params = [{transform_indices = @transform_0, window_bounds = array<i64: 8, 128>}, {transform_indices = @transform_1, window_bounds = array<i64: 8, 32>}, {pipeline_mode = #tpu.pipeline_mode<synchronous>, transform_indices = @transform_2, window_bounds = array<i64: 128, 256>}, {pipeline_mode = #tpu.pipeline_mode<synchronous>, transform_indices = @transform_3, window_bounds = array<i64: 1, 256>}, {pipeline_mode = #tpu.pipeline_mode<synchronous>, transform_indices = @transform_4, window_bounds = array<i64: 256, 128>}, {pipeline_mode = #tpu.pipeline_mode<synchronous>, transform_indices = @transform_5, window_bounds = array<i64: 1, 128>}, {pipeline_mode = #tpu.pipeline_mode<synchronous>, transform_indices = @transform_6, window_bounds = array<i64: 128, 64>}, {pipeline_mode = #tpu.pipeline_mode<synchronous>, transform_indices = @transform_7, window_bounds = array<i64: 1, 64>}, {pipeline_mode = #tpu.pipeline_mode<synchronous>, transform_indices = @transform_8, window_bounds = array<i64: 64, 128>}, {pipeline_mode = #tpu.pipeline_mode<synchronous>, transform_indices = @transform_9, window_bounds = array<i64: 1, 128>}, {pipeline_mode = #tpu.pipeline_mode<synchronous>, transform_indices = @transform_10, window_bounds = array<i64: 32, 64>}, {pipeline_mode = #tpu.pipeline_mode<synchronous>, transform_indices = @transform_11, window_bounds = array<i64: 1, 64>}, {pipeline_mode = #tpu.pipeline_mode<synchronous>, transform_indices = @transform_12, window_bounds = array<i64: 64, 128>}, {pipeline_mode = #tpu.pipeline_mode<synchronous>, transform_indices = @transform_13, window_bounds = array<i64: 1, 128>}, {pipeline_mode = #tpu.pipeline_mode<synchronous>, transform_indices = @transform_14, window_bounds = array<i64: 128, 256>}, {pipeline_mode = #tpu.pipeline_mode<synchronous>, transform_indices = @transform_15, window_bounds = array<i64: 1, 256>}, {pipeline_mode = #tpu.pipeline_mode<synchronous>, transform_indices = @transform_16, window_bounds = array<i64: 256, 128>}, {pipeline_mode = #tpu.pipeline_mode<synchronous>, transform_indices = @transform_17, window_bounds = array<i64: 1, 128>}, {transform_indices = @transform_18, window_bounds = array<i64: 8, 128>}, {transform_indices = @transform_19, window_bounds = array<i64: 8, 128>}]} {
    %c0 = arith.constant 0 : index
    %c0_0 = arith.constant 0 : index
    %0 = vector.load %arg1[%c0, %c0_0] : memref<8x128xbf16, #tpu.memory_space<vmem>>, vector<8x128xbf16>
    %c0_1 = arith.constant 0 : index
    %c0_2 = arith.constant 0 : index
    %1 = vector.load %arg3[%c0_1, %c0_2] : memref<128x256xbf16, #tpu.memory_space<vmem>>, vector<128x256xbf16>
    %cst = arith.constant dense<0.000000e+00> : vector<8x256xf32>
    %2 = tpu.matmul %0, %1, %cst {dimension_numbers = #tpu.dot_dimension_numbers<[1], [0], [0], [1], [0, 0, 1, 1], [], []>} : vector<8x128xbf16>, vector<128x256xbf16>, vector<8x256xf32> -> vector<8x256xf32>
    %c0_3 = arith.constant 0 : index
    %c0_4 = arith.constant 0 : index
    %3 = vector.load %arg4[%c0_3, %c0_4] : memref<1x256xf32, #tpu.memory_space<vmem>>, vector<1x256xf32>
    %4 = vector.broadcast %3 : vector<1x256xf32> to vector<8x256xf32>
    %5 = arith.addf %2, %4 : vector<8x256xf32>
    %cst_5 = arith.constant 0.000000e+00 : f32
    %6 = vector.broadcast %cst_5 : f32 to vector<8x256xf32>
    %7 = arith.maximumf %5, %6 : vector<8x256xf32>
    %8 = arith.truncf %7 : vector<8x256xf32> to vector<8x256xbf16>
    %c0_6 = arith.constant 0 : index
    %c0_7 = arith.constant 0 : index
    %9 = vector.load %arg5[%c0_6, %c0_7] : memref<256x128xbf16, #tpu.memory_space<vmem>>, vector<256x128xbf16>
    %cst_8 = arith.constant dense<0.000000e+00> : vector<8x128xf32>
    %10 = tpu.matmul %8, %9, %cst_8 {dimension_numbers = #tpu.dot_dimension_numbers<[1], [0], [0], [1], [0, 0, 1, 1], [], []>} : vector<8x256xbf16>, vector<256x128xbf16>, vector<8x128xf32> -> vector<8x128xf32>
    %c0_9 = arith.constant 0 : index
    %c0_10 = arith.constant 0 : index
    %11 = vector.load %arg6[%c0_9, %c0_10] : memref<1x128xf32, #tpu.memory_space<vmem>>, vector<1x128xf32>
    %12 = vector.broadcast %11 : vector<1x128xf32> to vector<8x128xf32>
    %13 = arith.addf %10, %12 : vector<8x128xf32>
    %cst_11 = arith.constant 0.000000e+00 : f32
    %14 = vector.broadcast %cst_11 : f32 to vector<8x128xf32>
    %15 = arith.maximumf %13, %14 : vector<8x128xf32>
    %16 = arith.truncf %15 : vector<8x128xf32> to vector<8x128xbf16>
    %c0_12 = arith.constant 0 : index
    %c0_13 = arith.constant 0 : index
    %17 = vector.load %arg7[%c0_12, %c0_13] : memref<128x64xbf16, #tpu.memory_space<vmem>>, vector<128x64xbf16>
    %cst_14 = arith.constant dense<0.000000e+00> : vector<8x64xf32>
    %18 = tpu.matmul %16, %17, %cst_14 {dimension_numbers = #tpu.dot_dimension_numbers<[1], [0], [0], [1], [0, 0, 1, 1], [], []>} : vector<8x128xbf16>, vector<128x64xbf16>, vector<8x64xf32> -> vector<8x64xf32>
    %c0_15 = arith.constant 0 : index
    %c0_16 = arith.constant 0 : index
    %19 = vector.load %arg8[%c0_15, %c0_16] : memref<1x64xf32, #tpu.memory_space<vmem>>, vector<1x64xf32>
    %20 = vector.broadcast %19 : vector<1x64xf32> to vector<8x64xf32>
    %21 = arith.addf %18, %20 : vector<8x64xf32>
    %cst_17 = arith.constant 0.000000e+00 : f32
    %22 = vector.broadcast %cst_17 : f32 to vector<8x64xf32>
    %23 = arith.maximumf %21, %22 : vector<8x64xf32>
    %24 = arith.truncf %23 : vector<8x64xf32> to vector<8x64xbf16>
    %c0_18 = arith.constant 0 : index
    %c0_19 = arith.constant 0 : index
    %25 = vector.load %arg9[%c0_18, %c0_19] : memref<64x128xbf16, #tpu.memory_space<vmem>>, vector<64x128xbf16>
    %cst_20 = arith.constant dense<0.000000e+00> : vector<8x128xf32>
    %26 = tpu.matmul %24, %25, %cst_20 {dimension_numbers = #tpu.dot_dimension_numbers<[1], [0], [0], [1], [0, 0, 1, 1], [], []>} : vector<8x64xbf16>, vector<64x128xbf16>, vector<8x128xf32> -> vector<8x128xf32>
    %c0_21 = arith.constant 0 : index
    %c0_22 = arith.constant 0 : index
    %27 = vector.load %arg10[%c0_21, %c0_22] : memref<1x128xf32, #tpu.memory_space<vmem>>, vector<1x128xf32>
    %28 = vector.broadcast %27 : vector<1x128xf32> to vector<8x128xf32>
    %29 = arith.addf %26, %28 : vector<8x128xf32>
    %c0_23 = arith.constant 0 : index
    %c0_24 = arith.constant 0 : index
    %30 = vector.load %arg20[%c0_23, %c0_24] : memref<8x128xf32, #tpu.memory_space<vmem>>, vector<8x128xf32>
    tpu.vector_store %arg20[%c0_23, %c0_24], %29 {strides = array<i32>} : memref<8x128xf32, #tpu.memory_space<vmem>>, vector<8x128xf32>,
    %31 = vector.extract_strided_slice %29 {offsets = [0, 0], sizes = [8, 32], strides = [1, 1]} : vector<8x128xf32> to vector<8x32xf32>
    %32 = vector.extract_strided_slice %29 {offsets = [0, 32], sizes = [8, 32], strides = [1, 1]} : vector<8x128xf32> to vector<8x32xf32>
    %c0_25 = arith.constant 0 : index
    %c0_26 = arith.constant 0 : index
    %33 = vector.load %arg2[%c0_25, %c0_26] : memref<8x32xbf16, #tpu.memory_space<vmem>>, vector<8x32xbf16>
    %34 = arith.extf %33 : vector<8x32xbf16> to vector<8x32xf32>
    %cst_27 = arith.constant 5.000000e-01 : f32
    %35 = vector.broadcast %cst_27 : f32 to vector<8x32xf32>
    %36 = arith.mulf %35, %32 : vector<8x32xf32>
    %37 = math.exp %36 : vector<8x32xf32>
    %38 = arith.mulf %34, %37 : vector<8x32xf32>
    %39 = arith.addf %38, %31 : vector<8x32xf32>
    %40 = arith.truncf %39 : vector<8x32xf32> to vector<8x32xbf16>
    %c0_28 = arith.constant 0 : index
    %c0_29 = arith.constant 0 : index
    %41 = vector.load %arg11[%c0_28, %c0_29] : memref<32x64xbf16, #tpu.memory_space<vmem>>, vector<32x64xbf16>
    %cst_30 = arith.constant dense<0.000000e+00> : vector<8x64xf32>
    %42 = tpu.matmul %40, %41, %cst_30 {dimension_numbers = #tpu.dot_dimension_numbers<[1], [0], [0], [1], [0, 0, 1, 1], [], []>} : vector<8x32xbf16>, vector<32x64xbf16>, vector<8x64xf32> -> vector<8x64xf32>
    %c0_31 = arith.constant 0 : index
    %c0_32 = arith.constant 0 : index
    %43 = vector.load %arg12[%c0_31, %c0_32] : memref<1x64xf32, #tpu.memory_space<vmem>>, vector<1x64xf32>
    %44 = vector.broadcast %43 : vector<1x64xf32> to vector<8x64xf32>
    %45 = arith.addf %42, %44 : vector<8x64xf32>
    %cst_33 = arith.constant 0.000000e+00 : f32
    %46 = vector.broadcast %cst_33 : f32 to vector<8x64xf32>
    %47 = arith.maximumf %45, %46 : vector<8x64xf32>
    %48 = arith.truncf %47 : vector<8x64xf32> to vector<8x64xbf16>
    %c0_34 = arith.constant 0 : index
    %c0_35 = arith.constant 0 : index
    %49 = vector.load %arg13[%c0_34, %c0_35] : memref<64x128xbf16, #tpu.memory_space<vmem>>, vector<64x128xbf16>
    %cst_36 = arith.constant dense<0.000000e+00> : vector<8x128xf32>
    %50 = tpu.matmul %48, %49, %cst_36 {dimension_numbers = #tpu.dot_dimension_numbers<[1], [0], [0], [1], [0, 0, 1, 1], [], []>} : vector<8x64xbf16>, vector<64x128xbf16>, vector<8x128xf32> -> vector<8x128xf32>
    %c0_37 = arith.constant 0 : index
    %c0_38 = arith.constant 0 : index
    %51 = vector.load %arg14[%c0_37, %c0_38] : memref<1x128xf32, #tpu.memory_space<vmem>>, vector<1x128xf32>
    %52 = vector.broadcast %51 : vector<1x128xf32> to vector<8x128xf32>
    %53 = arith.addf %50, %52 : vector<8x128xf32>
    %cst_39 = arith.constant 0.000000e+00 : f32
    %54 = vector.broadcast %cst_39 : f32 to vector<8x128xf32>
    %55 = arith.maximumf %53, %54 : vector<8x128xf32>
    %56 = arith.truncf %55 : vector<8x128xf32> to vector<8x128xbf16>
    %c0_40 = arith.constant 0 : index
    %c0_41 = arith.constant 0 : index
    %57 = vector.load %arg15[%c0_40, %c0_41] : memref<128x256xbf16, #tpu.memory_space<vmem>>, vector<128x256xbf16>
    %cst_42 = arith.constant dense<0.000000e+00> : vector<8x256xf32>
    %58 = tpu.matmul %56, %57, %cst_42 {dimension_numbers = #tpu.dot_dimension_numbers<[1], [0], [0], [1], [0, 0, 1, 1], [], []>} : vector<8x128xbf16>, vector<128x256xbf16>, vector<8x256xf32> -> vector<8x256xf32>
    %c0_43 = arith.constant 0 : index
    %c0_44 = arith.constant 0 : index
    %59 = vector.load %arg16[%c0_43, %c0_44] : memref<1x256xf32, #tpu.memory_space<vmem>>, vector<1x256xf32>
    %60 = vector.broadcast %59 : vector<1x256xf32> to vector<8x256xf32>
    %61 = arith.addf %58, %60 : vector<8x256xf32>
    %cst_45 = arith.constant 0.000000e+00 : f32
    %62 = vector.broadcast %cst_45 : f32 to vector<8x256xf32>
    %63 = arith.maximumf %61, %62 : vector<8x256xf32>
    %64 = arith.truncf %63 : vector<8x256xf32> to vector<8x256xbf16>
    %c0_46 = arith.constant 0 : index
    %c0_47 = arith.constant 0 : index
    %65 = vector.load %arg17[%c0_46, %c0_47] : memref<256x128xbf16, #tpu.memory_space<vmem>>, vector<256x128xbf16>
    %cst_48 = arith.constant dense<0.000000e+00> : vector<8x128xf32>
    %66 = tpu.matmul %64, %65, %cst_48 {dimension_numbers = #tpu.dot_dimension_numbers<[1], [0], [0], [1], [0, 0, 1, 1], [], []>} : vector<8x256xbf16>, vector<256x128xbf16>, vector<8x128xf32> -> vector<8x128xf32>
    %c0_49 = arith.constant 0 : index
    %c0_50 = arith.constant 0 : index
    %67 = vector.load %arg18[%c0_49, %c0_50] : memref<1x128xf32, #tpu.memory_space<vmem>>, vector<1x128xf32>
    %68 = vector.broadcast %67 : vector<1x128xf32> to vector<8x128xf32>
    %69 = arith.addf %66, %68 : vector<8x128xf32>
    %70 = arith.truncf %69 : vector<8x128xf32> to vector<8x128xbf16>
    %c0_51 = arith.constant 0 : index
    %c0_52 = arith.constant 0 : index
    %71 = vector.load %arg19[%c0_51, %c0_52] : memref<8x128xbf16, #tpu.memory_space<vmem>>, vector<8x128xbf16>
    tpu.vector_store %arg19[%c0_51, %c0_52], %70 {strides = array<i32>} : memref<8x128xbf16, #tpu.memory_space<vmem>>, vector<8x128xbf16>,
    return
  }
  func.func @transform_0(%arg0: i32) -> (i32, i32) {
    %c0_i32 = arith.constant 0 : i32
    %c0_i32_0 = arith.constant 0 : i32
    return %arg0, %c0_i32 : i32, i32
  }
  func.func @transform_1(%arg0: i32) -> (i32, i32) {
    %c0_i32 = arith.constant 0 : i32
    %c0_i32_0 = arith.constant 0 : i32
    return %arg0, %c0_i32 : i32, i32
  }
  func.func @transform_2(%arg0: i32) -> (i32, i32) {
    %c0_i32 = arith.constant 0 : i32
    %c0_i32_0 = arith.constant 0 : i32
    %c0_i32_1 = arith.constant 0 : i32
    return %c0_i32, %c0_i32_0 : i32, i32
  }
  func.func @transform_3(%arg0: i32) -> (i32, i32) {
    %c0_i32 = arith.constant 0 : i32
    %c0_i32_0 = arith.constant 0 : i32
    %c0_i32_1 = arith.constant 0 : i32
    return %c0_i32, %c0_i32_0 : i32, i32
  }
  func.func @transform_4(%arg0: i32) -> (i32, i32) {
    %c0_i32 = arith.constant 0 : i32
    %c0_i32_0 = arith.constant 0 : i32
    %c0_i32_1 = arith.constant 0 : i32
    return %c0_i32, %c0_i32_0 : i32, i32
  }
  func.func @transform_5(%arg0: i32) -> (i32, i32) {
    %c0_i32 = arith.constant 0 : i32
    %c0_i32_0 = arith.constant 0 : i32
    %c0_i32_1 = arith.constant 0 : i32
    return %c0_i32, %c0_i32_0 : i32, i32
  }
  func.func @transform_6(%arg0: i32) -> (i32, i32) {
    %c0_i32 = arith.constant 0 : i32
    %c0_i32_0 = arith.constant 0 : i32
    %c0_i32_1 = arith.constant 0 : i32
    return %c0_i32, %c0_i32_0 : i32, i32
  }
  func.func @transform_7(%arg0: i32) -> (i32, i32) {
    %c0_i32 = arith.constant 0 : i32
    %c0_i32_0 = arith.constant 0 : i32
    %c0_i32_1 = arith.constant 0 : i32
    return %c0_i32, %c0_i32_0 : i32, i32
  }
  func.func @transform_8(%arg0: i32) -> (i32, i32) {
    %c0_i32 = arith.constant 0 : i32
    %c0_i32_0 = arith.constant 0 : i32
    %c0_i32_1 = arith.constant 0 : i32
    return %c0_i32, %c0_i32_0 : i32, i32
  }
  func.func @transform_9(%arg0: i32) -> (i32, i32) {
    %c0_i32 = arith.constant 0 : i32
    %c0_i32_0 = arith.constant 0 : i32
    %c0_i32_1 = arith.constant 0 : i32
    return %c0_i32, %c0_i32_0 : i32, i32
  }
  func.func @transform_10(%arg0: i32) -> (i32, i32) {
    %c0_i32 = arith.constant 0 : i32
    %c0_i32_0 = arith.constant 0 : i32
    %c0_i32_1 = arith.constant 0 : i32
    return %c0_i32, %c0_i32_0 : i32, i32
  }
  func.func @transform_11(%arg0: i32) -> (i32, i32) {
    %c0_i32 = arith.constant 0 : i32
    %c0_i32_0 = arith.constant 0 : i32
    %c0_i32_1 = arith.constant 0 : i32
    return %c0_i32, %c0_i32_0 : i32, i32
  }
  func.func @transform_12(%arg0: i32) -> (i32, i32) {
    %c0_i32 = arith.constant 0 : i32
    %c0_i32_0 = arith.constant 0 : i32
    %c0_i32_1 = arith.constant 0 : i32
    return %c0_i32, %c0_i32_0 : i32, i32
  }
  func.func @transform_13(%arg0: i32) -> (i32, i32) {
    %c0_i32 = arith.constant 0 : i32
    %c0_i32_0 = arith.constant 0 : i32
    %c0_i32_1 = arith.constant 0 : i32
    return %c0_i32, %c0_i32_0 : i32, i32
  }
  func.func @transform_14(%arg0: i32) -> (i32, i32) {
    %c0_i32 = arith.constant 0 : i32
    %c0_i32_0 = arith.constant 0 : i32
    %c0_i32_1 = arith.constant 0 : i32
    return %c0_i32, %c0_i32_0 : i32, i32
  }
  func.func @transform_15(%arg0: i32) -> (i32, i32) {
    %c0_i32 = arith.constant 0 : i32
    %c0_i32_0 = arith.constant 0 : i32
    %c0_i32_1 = arith.constant 0 : i32
    return %c0_i32, %c0_i32_0 : i32, i32
  }
  func.func @transform_16(%arg0: i32) -> (i32, i32) {
    %c0_i32 = arith.constant 0 : i32
    %c0_i32_0 = arith.constant 0 : i32
    %c0_i32_1 = arith.constant 0 : i32
    return %c0_i32, %c0_i32_0 : i32, i32
  }
  func.func @transform_17(%arg0: i32) -> (i32, i32) {
    %c0_i32 = arith.constant 0 : i32
    %c0_i32_0 = arith.constant 0 : i32
    %c0_i32_1 = arith.constant 0 : i32
    return %c0_i32, %c0_i32_0 : i32, i32
  }
  func.func @transform_18(%arg0: i32) -> (i32, i32) {
    %c0_i32 = arith.constant 0 : i32
    %c0_i32_0 = arith.constant 0 : i32
    return %arg0, %c0_i32 : i32, i32
  }
  func.func @transform_19(%arg0: i32) -> (i32, i32) {
    %c0_i32 = arith.constant 0 : i32
    %c0_i32_0 = arith.constant 0 : i32
    return %arg0, %c0_i32 : i32, i32
  }
}

</mosaic_0001>

<llo_original>
// kernel: tpu_custom_call.1
$region0: #{tpu_custom_call.1}
  #allocation0 [shape = 'u32[]', space=smem, size = 0x4, offset = 0x4, fixed_abs, tag = 'smem constant byte address 0x4 - core index']
  #allocation1 [shape = 'u32[72,128]{1,0:T(1,128)}', space=vmem, size = 0x9000, scoped, tag = 'internal scratch']
  %s0 = inlined_call_operand.vmem [shape: bf16[8,128], index: 0, kind: input, shape index: {}]
  %s1 = inlined_call_operand.vmem [shape: bf16[8,32], index: 1, kind: input, shape index: {}]
  %s2 = inlined_call_operand.hbm [shape: bf16[128,256], index: 2, kind: input, shape index: {}]
  %s3 = inlined_call_operand.vmem [shape: f32[1,256], index: 3, kind: input, shape index: {}]
  %s4 = inlined_call_operand.hbm [shape: bf16[256,128], index: 4, kind: input, shape index: {}]
  %s5 = inlined_call_operand.vmem [shape: f32[1,128], index: 5, kind: input, shape index: {}]
  %s6 = inlined_call_operand.vmem [shape: bf16[128,64], index: 6, kind: input, shape index: {}]
  %s7 = inlined_call_operand.vmem [shape: f32[1,64], index: 7, kind: input, shape index: {}]
  %s8 = inlined_call_operand.vmem [shape: bf16[64,128], index: 8, kind: input, shape index: {}]
  %s9 = inlined_call_operand.vmem [shape: f32[1,128], index: 9, kind: input, shape index: {}]
  %s10 = inlined_call_operand.vmem [shape: bf16[32,64], index: 10, kind: input, shape index: {}]
  %s11 = inlined_call_operand.vmem [shape: f32[1,64], index: 11, kind: input, shape index: {}]
  %s12 = inlined_call_operand.vmem [shape: bf16[64,128], index: 12, kind: input, shape index: {}]
  %s13 = inlined_call_operand.vmem [shape: f32[1,128], index: 13, kind: input, shape index: {}]
  %s14 = inlined_call_operand.hbm [shape: bf16[128,256], index: 14, kind: input, shape index: {}]
  %s15 = inlined_call_operand.vmem [shape: f32[1,256], index: 15, kind: input, shape index: {}]
  %s16 = inlined_call_operand.hbm [shape: bf16[256,128], index: 16, kind: input, shape index: {}]
  %s17 = inlined_call_operand.vmem [shape: f32[1,128], index: 17, kind: input, shape index: {}]
  %s18 = inlined_call_operand.hbm [shape: bf16[8,128], index: 18, kind: output, shape index: {0}]
  %s19 = inlined_call_operand.hbm [shape: f32[8,128], index: 19, kind: output, shape index: {1}]
  %20 = xla_tuple %s18, %s19
  %s21 = sld [smem:[#allocation0]]
  $region106: #{tpu_custom_call.1} parent=0
    _
  %s23 = ssub.s32 1, %s21
  %s24 = scalar_select 0, %s23, %s21
  $region1: #{tpu_custom_call.1} parent=0
    #allocation2 [shape = 'u8[65536]{0}', space=vmem, size = 0x10000, scoped, tag = 'input window, operand 2, single buffered']
    #allocation3 [shape = 's32[1]{0}', space=sflag, size = 0x4, scoped, tag = 'scoped memory for tpu_custom_call.1']
    #allocation4 [shape = 's32[1]{0}', space=sflag, size = 0x4, scoped, tag = 'scoped memory for tpu_custom_call.1']
    #allocation5 [shape = 'u8[65536]{0}', space=vmem, size = 0x10000, scoped, tag = 'input window, operand 4, single buffered']
    #allocation6 [shape = 's32[1]{0}', space=sflag, size = 0x4, scoped, tag = 'scoped memory for tpu_custom_call.1']
    #allocation7 [shape = 'u8[65536]{0}', space=vmem, size = 0x10000, scoped, tag = 'input window, operand 14, single buffered']
    #allocation8 [shape = 'u8[65536]{0}', space=vmem, size = 0x10000, scoped, tag = 'input window, operand 16, single buffered']
    #allocation9 [shape = 's32[1]{0}', space=sflag, size = 0x4, scoped, tag = 'scoped memory for tpu_custom_call.1']
    #allocation10 [shape = 'u8[2048]{0}', space=vmem, size = 0x800, scoped, tag = 'output window, operand 0, single buffered']
    #allocation11 [shape = 'u8[4096]{0}', space=vmem, size = 0x1000, scoped, tag = 'output window, operand 1, single buffered']
    #allocation12 [shape = 's32[1]{0}', space=sflag, size = 0x4, scoped, tag = 'scoped memory for tpu_custom_call.1']
    %25 = vsyncpa [#allocation3], 0
    %26 = vsyncpa [#allocation6], 0
    %27 = vsyncpa [#allocation9], 0
    %28 = vsyncpa [#allocation4], 0
    %29 = vsyncpa [#allocation12], 0
    // Predicated region
    $region2: #{tpu_custom_call.1} parent=1 // pred_check
      _
    $region3: #{tpu_custom_call.1} parent=1 // pred_check_branch
      %31 = sbr.rel (0) target = $region5
    $region4: #{tpu_custom_call.1} parent=1 // pred_region
      _
    $region5: #{tpu_custom_call.1} parent=1 // pred_fallthru
      _
    // Predicated region
    $region6: #{tpu_custom_call.1} parent=1 // pred_check
      _
    $region7: #{tpu_custom_call.1} parent=1 // pred_check_branch
      %33 = sbr.rel (0) target = $region9
    $region8: #{tpu_custom_call.1} parent=1 // pred_region
      _
    $region9: #{tpu_custom_call.1} parent=1 // pred_fallthru
      _
    // Predicated region
    $region10: #{tpu_custom_call.1} parent=1 // pred_check
      _
    $region11: #{tpu_custom_call.1} parent=1 // pred_check_branch
      %35 = sbr.rel (0) target = $region13
    $region12: #{tpu_custom_call.1} parent=1 // pred_region
      %37 = vsyncadd [#allocation3], 0
      %s38 = sshll.u32 %s2, 4
      %s39 = int_to_ptr.hbm [resolvable:$true] %s38
      %s40 = sshll.u32 [#allocation2], 4
      %s41 = int_to_ptr.vmem [resolvable:$true] %s40
      %46 = dma.hbm_to_vmem [thread:$0]  %s39, 2048, %s41, [#allocation3], 128, 128, 8
    $region13: #{tpu_custom_call.1} parent=1 // pred_fallthru
      _
    // Predicated region
    $region14: #{tpu_custom_call.1} parent=1 // pred_check
      _
    $region15: #{tpu_custom_call.1} parent=1 // pred_check_branch
      %48 = sbr.rel (0) target = $region17
    $region16: #{tpu_custom_call.1} parent=1 // pred_region
      _
    $region17: #{tpu_custom_call.1} parent=1 // pred_fallthru
      _
    // Predicated region
    $region18: #{tpu_custom_call.1} parent=1 // pred_check
      _
    $region19: #{tpu_custom_call.1} parent=1 // pred_check_branch
      %50 = sbr.rel (0) target = $region21
    $region20: #{tpu_custom_call.1} parent=1 // pred_region
      %52 = vsyncadd [#allocation6], 0
      %s53 = sshll.u32 %s4, 4
      %s54 = int_to_ptr.hbm [resolvable:$true] %s53
      %s55 = sshll.u32 [#allocation5], 4
      %s56 = int_to_ptr.vmem [resolvable:$true] %s55
      %61 = dma.hbm_to_vmem [thread:$0]  %s54, 2048, %s56, [#allocation6], 64, 64, 4
    $region21: #{tpu_custom_call.1} parent=1 // pred_fallthru
      _
    // Predicated region
    $region22: #{tpu_custom_call.1} parent=1 // pred_check
      _
    $region23: #{tpu_custom_call.1} parent=1 // pred_check_branch
      %63 = sbr.rel (0) target = $region25
    $region24: #{tpu_custom_call.1} parent=1 // pred_region
      _
    $region25: #{tpu_custom_call.1} parent=1 // pred_fallthru
      _
    // Predicated region
    $region26: #{tpu_custom_call.1} parent=1 // pred_check
      _
    $region27: #{tpu_custom_call.1} parent=1 // pred_check_branch
      %65 = sbr.rel (0) target = $region29
    $region28: #{tpu_custom_call.1} parent=1 // pred_region
      _
    $region29: #{tpu_custom_call.1} parent=1 // pred_fallthru
      _
    // Predicated region
    $region30: #{tpu_custom_call.1} parent=1 // pred_check
      _
    $region31: #{tpu_custom_call.1} parent=1 // pred_check_branch
      %67 = sbr.rel (0) target = $region33
    $region32: #{tpu_custom_call.1} parent=1 // pred_region
      _
    $region33: #{tpu_custom_call.1} parent=1 // pred_fallthru
      _
    // Predicated region
    $region34: #{tpu_custom_call.1} parent=1 // pred_check
      _
    $region35: #{tpu_custom_call.1} parent=1 // pred_check_branch
      %69 = sbr.rel (0) target = $region37
    $region36: #{tpu_custom_call.1} parent=1 // pred_region
      _
    $region37: #{tpu_custom_call.1} parent=1 // pred_fallthru
      _
    // Predicated region
    $region38: #{tpu_custom_call.1} parent=1 // pred_check
      _
    $region39: #{tpu_custom_call.1} parent=1 // pred_check_branch
      %71 = sbr.rel (0) target = $region41
    $region40: #{tpu_custom_call.1} parent=1 // pred_region
      _
    $region41: #{tpu_custom_call.1} parent=1 // pred_fallthru
      _
    // Predicated region
    $region42: #{tpu_custom_call.1} parent=1 // pred_check
      _
    $region43: #{tpu_custom_call.1} parent=1 // pred_check_branch
      %73 = sbr.rel (0) target = $region45
    $region44: #{tpu_custom_call.1} parent=1 // pred_region
      _
    $region45: #{tpu_custom_call.1} parent=1 // pred_fallthru
      _
    // Predicated region
    $region46: #{tpu_custom_call.1} parent=1 // pred_check
      _
    $region47: #{tpu_custom_call.1} parent=1 // pred_check_branch
      %75 = sbr.rel (0) target = $region49
    $region48: #{tpu_custom_call.1} parent=1 // pred_region
      _
    $region49: #{tpu_custom_call.1} parent=1 // pred_fallthru
      _
    // Predicated region
    $region50: #{tpu_custom_call.1} parent=1 // pred_check
      _
    $region51: #{tpu_custom_call.1} parent=1 // pred_check_branch
      %77 = sbr.rel (0) target = $region53
    $region52: #{tpu_custom_call.1} parent=1 // pred_region
      _
    $region53: #{tpu_custom_call.1} parent=1 // pred_fallthru
      _
    // Predicated region
    $region54: #{tpu_custom_call.1} parent=1 // pred_check
      _
    $region55: #{tpu_custom_call.1} parent=1 // pred_check_branch
      %79 = sbr.rel (0) target = $region57
    $region56: #{tpu_custom_call.1} parent=1 // pred_region
      _
    $region57: #{tpu_custom_call.1} parent=1 // pred_fallthru
      _
    // Predicated region
    $region58: #{tpu_custom_call.1} parent=1 // pred_check
      _
    $region59: #{tpu_custom_call.1} parent=1 // pred_check_branch
      %81 = sbr.rel (0) target = $region61
    $region60: #{tpu_custom_call.1} parent=1 // pred_region
      %83 = vsyncadd [#allocation6], 0
      %s84 = sshll.u32 %s14, 4
      %s85 = int_to_ptr.hbm [resolvable:$true] %s84
      %s86 = sshll.u32 [#allocation7], 4
      %s87 = int_to_ptr.vmem [resolvable:$true] %s86
      %92 = dma.hbm_to_vmem [thread:$0]  %s85, 2048, %s87, [#allocation6], 128, 128, 8
    $region61: #{tpu_custom_call.1} parent=1 // pred_fallthru
      _
    // Predicated region
    $region62: #{tpu_custom_call.1} parent=1 // pred_check
      _
    $region63: #{tpu_custom_call.1} parent=1 // pred_check_branch
      %94 = sbr.rel (0) target = $region65
    $region64: #{tpu_custom_call.1} parent=1 // pred_region
      _
    $region65: #{tpu_custom_call.1} parent=1 // pred_fallthru
      _
    // Predicated region
    $region66: #{tpu_custom_call.1} parent=1 // pred_check
      _
    $region67: #{tpu_custom_call.1} parent=1 // pred_check_branch
      %96 = sbr.rel (0) target = $region69
    $region68: #{tpu_custom_call.1} parent=1 // pred_region
      %98 = vsyncadd [#allocation9], 0
      %s99 = sshll.u32 %s16, 4
      %s100 = int_to_ptr.hbm [resolvable:$true] %s99
      %s101 = sshll.u32 [#allocation8], 4
      %s102 = int_to_ptr.vmem [resolvable:$true] %s101
      %107 = dma.hbm_to_vmem [thread:$0]  %s100, 2048, %s102, [#allocation9], 64, 64, 4
    $region69: #{tpu_custom_call.1} parent=1 // pred_fallthru
      _
    // Predicated region
    $region70: #{tpu_custom_call.1} parent=1 // pred_check
      _
    $region71: #{tpu_custom_call.1} parent=1 // pred_check_branch
      %109 = sbr.rel (0) target = $region73
    $region72: #{tpu_custom_call.1} parent=1 // pred_region
      _
    $region73: #{tpu_custom_call.1} parent=1 // pred_fallthru
      _
    // Predicated region
    $region74: #{tpu_custom_call.1} parent=1 // pred_check
      _
    $region75: #{tpu_custom_call.1} parent=1 // pred_check_branch
      %111 = sbr.rel (0) target = $region77
    $region76: #{tpu_custom_call.1} parent=1 // pred_region
      %113 = dma.done [#allocation3], 2048
    $region77: #{tpu_custom_call.1} parent=1 // pred_fallthru
      _
    // Predicated region
    $region78: #{tpu_custom_call.1} parent=1 // pred_check
      _
    $region79: #{tpu_custom_call.1} parent=1 // pred_check_branch
      %115 = sbr.rel (0) target = $region81
    $region80: #{tpu_custom_call.1} parent=1 // pred_region
      %117 = dma.done [#allocation6], 2048
    $region81: #{tpu_custom_call.1} parent=1 // pred_fallthru
      _
    // Predicated region
    $region82: #{tpu_custom_call.1} parent=1 // pred_check
      _
    $region83: #{tpu_custom_call.1} parent=1 // pred_check_branch
      %119 = sbr.rel (0) target = $region85
    $region84: #{tpu_custom_call.1} parent=1 // pred_region
      %121 = dma.done [#allocation6], 2048
    $region85: #{tpu_custom_call.1} parent=1 // pred_fallthru
      _
    // Predicated region
    $region86: #{tpu_custom_call.1} parent=1 // pred_check
      _
    $region87: #{tpu_custom_call.1} parent=1 // pred_check_branch
      %123 = sbr.rel (0) target = $region89
    $region88: #{tpu_custom_call.1} parent=1 // pred_region
      %125 = dma.done [#allocation9], 2048
    $region89: #{tpu_custom_call.1} parent=1 // pred_fallthru
      _
    %v127 = vld [vmem:[%s0] sm:$0xf]
    %v128 = vld [vmem:[#allocation2] sm:$0xff]
    %v129 = vld [vmem:[#allocation2 + $0x8] sm:$0xff]
    %v130 = vld [vmem:[#allocation2 + $0x10] sm:$0xff]
    %v131 = vld [vmem:[#allocation2 + $0x18] sm:$0xff]
    %v132 = vld [vmem:[#allocation2 + $0x20] sm:$0xff]
    %v133 = vld [vmem:[#allocation2 + $0x28] sm:$0xff]
    %v134 = vld [vmem:[#allocation2 + $0x30] sm:$0xff]
    %v135 = vld [vmem:[#allocation2 + $0x38] sm:$0xff]
    %v136 = vld [vmem:[#allocation2 + $0x40] sm:$0xff]
    %v137 = vld [vmem:[#allocation2 + $0x48] sm:$0xff]
    %v138 = vld [vmem:[#allocation2 + $0x50] sm:$0xff]
    %v139 = vld [vmem:[#allocation2 + $0x58] sm:$0xff]
    %v140 = vld [vmem:[#allocation2 + $0x60] sm:$0xff]
    %v141 = vld [vmem:[#allocation2 + $0x68] sm:$0xff]
    %v142 = vld [vmem:[#allocation2 + $0x70] sm:$0xff]
    %v143 = vld [vmem:[#allocation2 + $0x78] sm:$0xff]
    %v144 = vld [vmem:[%s3] sm:$0x3]
    %v146 = vperm.slane %v144, 0
    %v147 = vperm.slane %v144, 1
    %v166 = vunpack.c.l.b16 %v128
    %v167 = vunpack.c.h.b16 %v128
    %v168 = vunpack.c.l.b16 %v129
    %v169 = vunpack.c.h.b16 %v129
    %v170 = vunpack.c.l.b16 %v130
    %v171 = vunpack.c.h.b16 %v130
    %v172 = vunpack.c.l.b16 %v131
    %v173 = vunpack.c.h.b16 %v131
    %v174 = vunpack.c.l.b16 %v132
    %v175 = vunpack.c.h.b16 %v132
    %v176 = vunpack.c.l.b16 %v133
    %v177 = vunpack.c.h.b16 %v133
    %v178 = vunpack.c.l.b16 %v134
    %v179 = vunpack.c.h.b16 %v134
    %v180 = vunpack.c.l.b16 %v135
    %v181 = vunpack.c.h.b16 %v135
    %v182 = vunpack.c.l.b16 %v136
    %v183 = vunpack.c.h.b16 %v136
    %v184 = vunpack.c.l.b16 %v137
    %v185 = vunpack.c.h.b16 %v137
    %v186 = vunpack.c.l.b16 %v138
    %v187 = vunpack.c.h.b16 %v138
    %v188 = vunpack.c.l.b16 %v139
    %v189 = vunpack.c.h.b16 %v139
    %v190 = vunpack.c.l.b16 %v140
    %v191 = vunpack.c.h.b16 %v140
    %v192 = vunpack.c.l.b16 %v141
    %v193 = vunpack.c.h.b16 %v141
    %v194 = vunpack.c.l.b16 %v142
    %v195 = vunpack.c.h.b16 %v142
    %v196 = vunpack.c.l.b16 %v143
    %v197 = vunpack.c.h.b16 %v143
    %v198 = vpack.c.b16 %v168, %v166
    %v199 = vpack.c.b16 %v169, %v167
    %v200 = vpack.c.b16 %v172, %v170
    %v201 = vpack.c.b16 %v173, %v171
    %v202 = vpack.c.b16 %v176, %v174
    %v203 = vpack.c.b16 %v177, %v175
    %v204 = vpack.c.b16 %v180, %v178
    %v205 = vpack.c.b16 %v181, %v179
    %v206 = vpack.c.b16 %v184, %v182
    %v207 = vpack.c.b16 %v185, %v183
    %v208 = vpack.c.b16 %v188, %v186
    %v209 = vpack.c.b16 %v189, %v187
    %v210 = vpack.c.b16 %v192, %v190
    %v211 = vpack.c.b16 %v193, %v191
    %v212 = vpack.c.b16 %v196, %v194
    %v213 = vpack.c.b16 %v197, %v195
    %230 = vmatpush.bf16.msra.mxu0 %v212
    %231 = vmatpush.bf16.msra.mxu0 %v210
    %232 = vmatpush.bf16.msra.mxu0 %v208
    %233 = vmatpush.bf16.msra.mxu0 %v206
    %234 = vmatpush.bf16.msra.mxu0 %v204
    %235 = vmatpush.bf16.msra.mxu0 %v202
    %236 = vmatpush.bf16.msra.mxu0 %v200
    %237 = vmatpush.bf16.msra.mxu0 %v198
    %238 = vmatmul.bf16.gmra.mxu0 %v127
    %v239 = vpop.f32.mrf.mxu0
    %v240 = vadd.f32 %v146, %v239
    %v241 = vpop.f32.mrf.mxu0
    %242 = vdwg.mxu0
    %243 = vmatpush.bf16.msra.mxu0 %v213
    %244 = vmatpush.bf16.msra.mxu0 %v211
    %245 = vmatpush.bf16.msra.mxu0 %v209
    %246 = vmatpush.bf16.msra.mxu0 %v207
    %247 = vmatpush.bf16.msra.mxu0 %v205
    %248 = vmatpush.bf16.msra.mxu0 %v203
    %249 = vmatpush.bf16.msra.mxu0 %v201
    %250 = vmatpush.bf16.msra.mxu0 %v199
    %251 = vmatmul.bf16.gmra.mxu0 %v127
    %v252 = vpop.f32.mrf.mxu0
    %v253 = vadd.f32 %v147, %v252
    %v254 = vpop.f32.mrf.mxu0
    %255 = vdwg.mxu0
    %v256 = vmax.f32 %v240, 0.0
    %v257 = vmax.f32 %v253, 0.0
    %v258 = vpack.c.bf16 %v256, %v256
    %v259 = vpack.c.bf16 %v257, %v257
    %v260 = vld [vmem:[#allocation5] sm:$0xf]
    %v261 = vld [vmem:[#allocation5 + $0x4] sm:$0xf]
    %v262 = vld [vmem:[#allocation5 + $0x8] sm:$0xf]
    %v263 = vld [vmem:[#allocation5 + $0xc] sm:$0xf]
    %v264 = vld [vmem:[#allocation5 + $0x10] sm:$0xf]
    %v265 = vld [vmem:[#allocation5 + $0x14] sm:$0xf]
    %v266 = vld [vmem:[#allocation5 + $0x18] sm:$0xf]
    %v267 = vld [vmem:[#allocation5 + $0x1c] sm:$0xf]
    %v268 = vld [vmem:[#allocation5 + $0x20] sm:$0xf]
    %v269 = vld [vmem:[#allocation5 + $0x24] sm:$0xf]
    %v270 = vld [vmem:[#allocation5 + $0x28] sm:$0xf]
    %v271 = vld [vmem:[#allocation5 + $0x2c] sm:$0xf]
    %v272 = vld [vmem:[#allocation5 + $0x30] sm:$0xf]
    %v273 = vld [vmem:[#allocation5 + $0x34] sm:$0xf]
    %v274 = vld [vmem:[#allocation5 + $0x38] sm:$0xf]
    %v275 = vld [vmem:[#allocation5 + $0x3c] sm:$0xf]
    %v276 = vld [vmem:[#allocation5 + $0x40] sm:$0xf]
    %v277 = vld [vmem:[#allocation5 + $0x44] sm:$0xf]
    %v278 = vld [vmem:[#allocation5 + $0x48] sm:$0xf]
    %v279 = vld [vmem:[#allocation5 + $0x4c] sm:$0xf]
    %v280 = vld [vmem:[#allocation5 + $0x50] sm:$0xf]
    %v281 = vld [vmem:[#allocation5 + $0x54] sm:$0xf]
    %v282 = vld [vmem:[#allocation5 + $0x58] sm:$0xf]
    %v283 = vld [vmem:[#allocation5 + $0x5c] sm:$0xf]
    %v284 = vld [vmem:[#allocation5 + $0x60] sm:$0xf]
    %v285 = vld [vmem:[#allocation5 + $0x64] sm:$0xf]
    %v286 = vld [vmem:[#allocation5 + $0x68] sm:$0xf]
    %v287 = vld [vmem:[#allocation5 + $0x6c] sm:$0xf]
    %v288 = vld [vmem:[#allocation5 + $0x70] sm:$0xf]
    %v289 = vld [vmem:[#allocation5 + $0x74] sm:$0xf]
    %v290 = vld [vmem:[#allocation5 + $0x78] sm:$0xf]
    %v291 = vld [vmem:[#allocation5 + $0x7c] sm:$0xf]
    %v292 = vld [vmem:[%s5] sm:$0x1]
    %v294 = vperm.slane %v292, 0
    %v328 = vunpack.c.l.b16 %v260
    %v329 = vunpack.c.l.b16 %v261
    %v330 = vunpack.c.l.b16 %v262
    %v331 = vunpack.c.l.b16 %v263
    %v332 = vunpack.c.l.b16 %v264
    %v333 = vunpack.c.l.b16 %v265
    %v334 = vunpack.c.l.b16 %v266
    %v335 = vunpack.c.l.b16 %v267
    %v336 = vunpack.c.l.b16 %v268
    %v337 = vunpack.c.l.b16 %v269
    %v338 = vunpack.c.l.b16 %v270
    %v339 = vunpack.c.l.b16 %v271
    %v340 = vunpack.c.l.b16 %v272
    %v341 = vunpack.c.l.b16 %v273
    %v342 = vunpack.c.l.b16 %v274
    %v343 = vunpack.c.l.b16 %v275
    %v344 = vunpack.c.l.b16 %v276
    %v345 = vunpack.c.l.b16 %v277
    %v346 = vunpack.c.l.b16 %v278
    %v347 = vunpack.c.l.b16 %v279
    %v348 = vunpack.c.l.b16 %v280
    %v349 = vunpack.c.l.b16 %v281
    %v350 = vunpack.c.l.b16 %v282
    %v351 = vunpack.c.l.b16 %v283
    %v352 = vunpack.c.l.b16 %v284
    %v353 = vunpack.c.l.b16 %v285
    %v354 = vunpack.c.l.b16 %v286
    %v355 = vunpack.c.l.b16 %v287
    %v356 = vunpack.c.l.b16 %v288
    %v357 = vunpack.c.l.b16 %v289
    %v358 = vunpack.c.l.b16 %v290
    %v359 = vunpack.c.l.b16 %v291
    %v360 = vpack.c.b16 %v329, %v328
    %v361 = vpack.c.b16 %v331, %v330
    %v362 = vpack.c.b16 %v333, %v332
    %v363 = vpack.c.b16 %v335, %v334
    %v364 = vpack.c.b16 %v337, %v336
    %v365 = vpack.c.b16 %v339, %v338
    %v366 = vpack.c.b16 %v341, %v340
    %v367 = vpack.c.b16 %v343, %v342
    %v368 = vpack.c.b16 %v345, %v344
    %v369 = vpack.c.b16 %v347, %v346
    %v370 = vpack.c.b16 %v349, %v348
    %v371 = vpack.c.b16 %v351, %v350
    %v372 = vpack.c.b16 %v353, %v352
    %v373 = vpack.c.b16 %v355, %v354
    %v374 = vpack.c.b16 %v357, %v356
    %v375 = vpack.c.b16 %v359, %v358
    %392 = vmatpush.bf16.msra.mxu0 %v367
    %393 = vmatpush.bf16.msra.mxu0 %v366
    %394 = vmatpush.bf16.msra.mxu0 %v365
    %395 = vmatpush.bf16.msra.mxu0 %v364
    %396 = vmatpush.bf16.msra.mxu0 %v363
    %397 = vmatpush.bf16.msra.mxu0 %v362
    %398 = vmatpush.bf16.msra.mxu0 %v361
    %399 = vmatpush.bf16.msra.mxu0 %v360
    %400 = vmatmul.bf16.gmra.mxu0 %v258
    %v401 = vpop.f32.mrf.mxu0
    %v402 = vadd.f32 %v294, %v401
    %v403 = vpop.f32.mrf.mxu0
    %404 = vdwg.mxu0
    %405 = vmatpush.bf16.msra.mxu0 %v375
    %406 = vmatpush.bf16.msra.mxu0 %v374
    %407 = vmatpush.bf16.msra.mxu0 %v373
    %408 = vmatpush.bf16.msra.mxu0 %v372
    %409 = vmatpush.bf16.msra.mxu0 %v371
    %410 = vmatpush.bf16.msra.mxu0 %v370
    %411 = vmatpush.bf16.msra.mxu0 %v369
    %412 = vmatpush.bf16.msra.mxu0 %v368
    %413 = vmatmul.bf16.gmra.mxu0 %v259
    %v414 = vpop.f32.mrf.mxu0
    %v415 = vadd.f32 %v402, %v414
    %v416 = vpop.f32.mrf.mxu0
    %417 = vdwg.mxu0
    %v418 = vmax.f32 %v415, 0.0
    %v419 = vpack.c.bf16 %v418, %v418
    %v420 = vld [vmem:[%s6] sm:$0xf]
    %v421 = vld [vmem:[%s6 + $0x4] sm:$0xf]
    %v422 = vld [vmem:[%s6 + $0x8] sm:$0xf]
    %v423 = vld [vmem:[%s6 + $0xc] sm:$0xf]
    %v424 = vld [vmem:[%s6 + $0x10] sm:$0xf]
    %v425 = vld [vmem:[%s6 + $0x14] sm:$0xf]
    %v426 = vld [vmem:[%s6 + $0x18] sm:$0xf]
    %v427 = vld [vmem:[%s6 + $0x1c] sm:$0xf]
    %v428 = vld [vmem:[%s6 + $0x20] sm:$0xf]
    %v429 = vld [vmem:[%s6 + $0x24] sm:$0xf]
    %v430 = vld [vmem:[%s6 + $0x28] sm:$0xf]
    %v431 = vld [vmem:[%s6 + $0x2c] sm:$0xf]
    %v432 = vld [vmem:[%s6 + $0x30] sm:$0xf]
    %v433 = vld [vmem:[%s6 + $0x34] sm:$0xf]
    %v434 = vld [vmem:[%s6 + $0x38] sm:$0xf]
    %v435 = vld [vmem:[%s6 + $0x3c] sm:$0xf]
    %v436 = vld [vmem:[%s7] sm:$0x1]
    %v438 = vperm.slane %v436, 0
    %v456 = vunpack.c.l.b16 %v420
    %v457 = vunpack.c.l.b16 %v421
    %v458 = vunpack.c.l.b16 %v422
    %v459 = vunpack.c.l.b16 %v423
    %v460 = vunpack.c.l.b16 %v424
    %v461 = vunpack.c.l.b16 %v425
    %v462 = vunpack.c.l.b16 %v426
    %v463 = vunpack.c.l.b16 %v427
    %v464 = vunpack.c.l.b16 %v428
    %v465 = vunpack.c.l.b16 %v429
    %v466 = vunpack.c.l.b16 %v430
    %v467 = vunpack.c.l.b16 %v431
    %v468 = vunpack.c.l.b16 %v432
    %v469 = vunpack.c.l.b16 %v433
    %v470 = vunpack.c.l.b16 %v434
    %v471 = vunpack.c.l.b16 %v435
    %v472 = vpack.c.b16 %v457, %v456
    %v473 = vpack.c.b16 %v459, %v458
    %v474 = vpack.c.b16 %v461, %v460
    %v475 = vpack.c.b16 %v463, %v462
    %v476 = vpack.c.b16 %v465, %v464
    %v477 = vpack.c.b16 %v467, %v466
    %v478 = vpack.c.b16 %v469, %v468
    %v479 = vpack.c.b16 %v471, %v470
    %488 = vmatpush.bf16.msra.mxu0 %v479
    %489 = vmatpush.bf16.msra.mxu0 %v478
    %490 = vmatpush.bf16.msra.mxu0 %v477
    %491 = vmatpush.bf16.msra.mxu0 %v476
    %492 = vmatpush.bf16.msra.mxu0 %v475
    %493 = vmatpush.bf16.msra.mxu0 %v474
    %494 = vmatpush.bf16.msra.mxu0 %v473
    %495 = vmatpush.bf16.msra.mxu0 %v472
    %496 = vmatmul.bf16.gmra.mxu0 %v419
    %v497 = vpop.f32.mrf.mxu0
    %v498 = vadd.f32 %v438, %v497
    %v499 = vpop.f32.mrf.mxu0
    %500 = vdwg.mxu0
    %v501 = vmax.f32 %v498, 0.0
    %v502 = vpack.c.bf16 %v501, %v501
    %v503 = vld [vmem:[%s8] sm:$0xf]
    %v504 = vld [vmem:[%s8 + $0x4] sm:$0xf]
    %v505 = vld [vmem:[%s8 + $0x8] sm:$0xf]
    %v506 = vld [vmem:[%s8 + $0xc] sm:$0xf]
    %v507 = vld [vmem:[%s8 + $0x10] sm:$0xf]
    %v508 = vld [vmem:[%s8 + $0x14] sm:$0xf]
    %v509 = vld [vmem:[%s8 + $0x18] sm:$0xf]
    %v510 = vld [vmem:[%s8 + $0x1c] sm:$0xf]
    %v511 = vld [vmem:[%s9] sm:$0x1]
    %v513 = vperm.slane %v511, 0
    %v523 = vunpack.c.l.b16 %v503
    %v524 = vunpack.c.l.b16 %v504
    %v525 = vunpack.c.l.b16 %v505
    %v526 = vunpack.c.l.b16 %v506
    %v527 = vunpack.c.l.b16 %v507
    %v528 = vunpack.c.l.b16 %v508
    %v529 = vunpack.c.l.b16 %v509
    %v530 = vunpack.c.l.b16 %v510
    %v531 = vpack.c.b16 %v524, %v523
    %v532 = vpack.c.b16 %v526, %v525
    %v533 = vpack.c.b16 %v528, %v527
    %v534 = vpack.c.b16 %v530, %v529
    %vm539 = vcmask 523264
    %v541 = vsel %vm539, %v502, 0
    %543 = vmatpush.bf16.msra.mxu0 0
    %544 = vmatpush.bf16.msra.mxu0 0
    %545 = vmatpush.bf16.msra.mxu0 0
    %546 = vmatpush.bf16.msra.mxu0 0
    %547 = vmatpush.bf16.msra.mxu0 %v534
    %548 = vmatpush.bf16.msra.mxu0 %v533
    %549 = vmatpush.bf16.msra.mxu0 %v532
    %550 = vmatpush.bf16.msra.mxu0 %v531
    %551 = vmatmul.bf16.gmra.mxu0 %v541
    %v552 = vpop.f32.mrf.mxu0
    %v553 = vadd.f32 %v513, %v552
    %v554 = vpop.f32.mrf.mxu0
    %555 = vdwg.mxu0
    %556 = vst [vmem:[#allocation11] sm:$0xff] %v553
    %v557 = vld [vmem:[%s1] sm:$0xf]
    %v558 = vunpack.c.l.bf16 %v557
    %v559 = vmul.f32 %v553, 0.5
    %v560 = vmul.f32 %v559, 1.442695
    %v561 = vpow.pop %v560
    %563 = vrot.lane.b32.xlu0 %v561, 96
    %v564 = vpop.permute.xlu0 %563
    %v566 = vmul.f32 %v558, %v564
    %v567 = vadd.f32 %v566, %v553
    %v568 = vpack.c.bf16 %v567, %v567
    %v569 = vld [vmem:[%s10] sm:$0xf]
    %v570 = vld [vmem:[%s10 + $0x4] sm:$0xf]
    %v571 = vld [vmem:[%s10 + $0x8] sm:$0xf]
    %v572 = vld [vmem:[%s10 + $0xc] sm:$0xf]
    %v573 = vld [vmem:[%s11] sm:$0x1]
    %v575 = vperm.slane %v573, 0
    %v581 = vunpack.c.l.b16 %v569
    %v582 = vunpack.c.l.b16 %v570
    %v583 = vunpack.c.l.b16 %v571
    %v584 = vunpack.c.l.b16 %v572
    %v585 = vpack.c.b16 %v582, %v581
    %v586 = vpack.c.b16 %v584, %v583
    %vm589 = vcmask 261120
    %v591 = vsel %vm589, %v568, 0
    %593 = vmatpush.bf16.msra.mxu0 0
    %594 = vmatpush.bf16.msra.mxu0 0
    %595 = vmatpush.bf16.msra.mxu0 0
    %596 = vmatpush.bf16.msra.mxu0 0
    %597 = vmatpush.bf16.msra.mxu0 0
    %598 = vmatpush.bf16.msra.mxu0 0
    %599 = vmatpush.bf16.msra.mxu0 %v586
    %600 = vmatpush.bf16.msra.mxu0 %v585
    %601 = vmatmul.bf16.gmra.mxu0 %v591
    %v602 = vpop.f32.mrf.mxu0
    %v603 = vadd.f32 %v575, %v602
    %v604 = vpop.f32.mrf.mxu0
    %605 = vdwg.mxu0
    %v606 = vmax.f32 %v603, 0.0
    %v607 = vpack.c.bf16 %v606, %v606
    %v608 = vld [vmem:[%s12] sm:$0xf]
    %v609 = vld [vmem:[%s12 + $0x4] sm:$0xf]
    %v610 = vld [vmem:[%s12 + $0x8] sm:$0xf]
    %v611 = vld [vmem:[%s12 + $0xc] sm:$0xf]
    %v612 = vld [vmem:[%s12 + $0x10] sm:$0xf]
    %v613 = vld [vmem:[%s12 + $0x14] sm:$0xf]
    %v614 = vld [vmem:[%s12 + $0x18] sm:$0xf]
    %v615 = vld [vmem:[%s12 + $0x1c] sm:$0xf]
    %v616 = vld [vmem:[%s13] sm:$0x1]
    %v618 = vperm.slane %v616, 0
    %v628 = vunpack.c.l.b16 %v608
    %v629 = vunpack.c.l.b16 %v609
    %v630 = vunpack.c.l.b16 %v610
    %v631 = vunpack.c.l.b16 %v611
    %v632 = vunpack.c.l.b16 %v612
    %v633 = vunpack.c.l.b16 %v613
    %v634 = vunpack.c.l.b16 %v614
    %v635 = vunpack.c.l.b16 %v615
    %v636 = vpack.c.b16 %v629, %v628
    %v637 = vpack.c.b16 %v631, %v630
    %v638 = vpack.c.b16 %v633, %v632
    %v639 = vpack.c.b16 %v635, %v634
    %v645 = vsel %vm539, %v607, 0
    %647 = vmatpush.bf16.msra.mxu0 0
    %648 = vmatpush.bf16.msra.mxu0 0
    %649 = vmatpush.bf16.msra.mxu0 0
    %650 = vmatpush.bf16.msra.mxu0 0
    %651 = vmatpush.bf16.msra.mxu0 %v639
    %652 = vmatpush.bf16.msra.mxu0 %v638
    %653 = vmatpush.bf16.msra.mxu0 %v637
    %654 = vmatpush.bf16.msra.mxu0 %v636
    %655 = vmatmul.bf16.gmra.mxu0 %v645
    %v656 = vpop.f32.mrf.mxu0
    %v657 = vadd.f32 %v618, %v656
    %v658 = vpop.f32.mrf.mxu0
    %659 = vdwg.mxu0
    %v660 = vmax.f32 %v657, 0.0
    %v661 = vpack.c.bf16 %v660, %v660
    %v662 = vld [vmem:[#allocation7] sm:$0xff]
    %v663 = vld [vmem:[#allocation7 + $0x8] sm:$0xff]
    %v664 = vld [vmem:[#allocation7 + $0x10] sm:$0xff]
    %v665 = vld [vmem:[#allocation7 + $0x18] sm:$0xff]
    %v666 = vld [vmem:[#allocation7 + $0x20] sm:$0xff]
    %v667 = vld [vmem:[#allocation7 + $0x28] sm:$0xff]
    %v668 = vld [vmem:[#allocation7 + $0x30] sm:$0xff]
    %v669 = vld [vmem:[#allocation7 + $0x38] sm:$0xff]
    %v670 = vld [vmem:[#allocation7 + $0x40] sm:$0xff]
    %v671 = vld [vmem:[#allocation7 + $0x48] sm:$0xff]
    %v672 = vld [vmem:[#allocation7 + $0x50] sm:$0xff]
    %v673 = vld [vmem:[#allocation7 + $0x58] sm:$0xff]
    %v674 = vld [vmem:[#allocation7 + $0x60] sm:$0xff]
    %v675 = vld [vmem:[#allocation7 + $0x68] sm:$0xff]
    %v676 = vld [vmem:[#allocation7 + $0x70] sm:$0xff]
    %v677 = vld [vmem:[#allocation7 + $0x78] sm:$0xff]
    %v678 = vld [vmem:[%s15] sm:$0x3]
    %v680 = vperm.slane %v678, 0
    %v681 = vperm.slane %v678, 1
    %v700 = vunpack.c.l.b16 %v662
    %v701 = vunpack.c.h.b16 %v662
    %v702 = vunpack.c.l.b16 %v663
    %v703 = vunpack.c.h.b16 %v663
    %v704 = vunpack.c.l.b16 %v664
    %v705 = vunpack.c.h.b16 %v664
    %v706 = vunpack.c.l.b16 %v665
    %v707 = vunpack.c.h.b16 %v665
    %v708 = vunpack.c.l.b16 %v666
    %v709 = vunpack.c.h.b16 %v666
    %v710 = vunpack.c.l.b16 %v667
    %v711 = vunpack.c.h.b16 %v667
    %v712 = vunpack.c.l.b16 %v668
    %v713 = vunpack.c.h.b16 %v668
    %v714 = vunpack.c.l.b16 %v669
    %v715 = vunpack.c.h.b16 %v669
    %v716 = vunpack.c.l.b16 %v670
    %v717 = vunpack.c.h.b16 %v670
    %v718 = vunpack.c.l.b16 %v671
    %v719 = vunpack.c.h.b16 %v671
    %v720 = vunpack.c.l.b16 %v672
    %v721 = vunpack.c.h.b16 %v672
    %v722 = vunpack.c.l.b16 %v673
    %v723 = vunpack.c.h.b16 %v673
    %v724 = vunpack.c.l.b16 %v674
    %v725 = vunpack.c.h.b16 %v674
    %v726 = vunpack.c.l.b16 %v675
    %v727 = vunpack.c.h.b16 %v675
    %v728 = vunpack.c.l.b16 %v676
    %v729 = vunpack.c.h.b16 %v676
    %v730 = vunpack.c.l.b16 %v677
    %v731 = vunpack.c.h.b16 %v677
    %v732 = vpack.c.b16 %v702, %v700
    %v733 = vpack.c.b16 %v703, %v701
    %v734 = vpack.c.b16 %v706, %v704
    %v735 = vpack.c.b16 %v707, %v705
    %v736 = vpack.c.b16 %v710, %v708
    %v737 = vpack.c.b16 %v711, %v709
    %v738 = vpack.c.b16 %v714, %v712
    %v739 = vpack.c.b16 %v715, %v713
    %v740 = vpack.c.b16 %v718, %v716
    %v741 = vpack.c.b16 %v719, %v717
    %v742 = vpack.c.b16 %v722, %v720
    %v743 = vpack.c.b16 %v723, %v721
    %v744 = vpack.c.b16 %v726, %v724
    %v745 = vpack.c.b16 %v727, %v725
    %v746 = vpack.c.b16 %v730, %v728
    %v747 = vpack.c.b16 %v731, %v729
    %764 = vmatpush.bf16.msra.mxu0 %v746
    %765 = vmatpush.bf16.msra.mxu0 %v744
    %766 = vmatpush.bf16.msra.mxu0 %v742
    %767 = vmatpush.bf16.msra.mxu0 %v740
    %768 = vmatpush.bf16.msra.mxu0 %v738
    %769 = vmatpush.bf16.msra.mxu0 %v736
    %770 = vmatpush.bf16.msra.mxu0 %v734
    %771 = vmatpush.bf16.msra.mxu0 %v732
    %772 = vmatmul.bf16.gmra.mxu0 %v661
    %v773 = vpop.f32.mrf.mxu0
    %v774 = vadd.f32 %v680, %v773
    %v775 = vpop.f32.mrf.mxu0
    %776 = vdwg.mxu0
    %777 = vmatpush.bf16.msra.mxu0 %v747
    %778 = vmatpush.bf16.msra.mxu0 %v745
    %779 = vmatpush.bf16.msra.mxu0 %v743
    %780 = vmatpush.bf16.msra.mxu0 %v741
    %781 = vmatpush.bf16.msra.mxu0 %v739
    %782 = vmatpush.bf16.msra.mxu0 %v737
    %783 = vmatpush.bf16.msra.mxu0 %v735
    %784 = vmatpush.bf16.msra.mxu0 %v733
    %785 = vmatmul.bf16.gmra.mxu0 %v661
    %v786 = vpop.f32.mrf.mxu0
    %v787 = vadd.f32 %v681, %v786
    %v788 = vpop.f32.mrf.mxu0
    %789 = vdwg.mxu0
    %v790 = vmax.f32 %v774, 0.0
    %v791 = vmax.f32 %v787, 0.0
    %v792 = vpack.c.bf16 %v790, %v790
    %v793 = vpack.c.bf16 %v791, %v791
    %v794 = vld [vmem:[#allocation8] sm:$0xf]
    %v795 = vld [vmem:[#allocation8 + $0x4] sm:$0xf]
    %v796 = vld [vmem:[#allocation8 + $0x8] sm:$0xf]
    %v797 = vld [vmem:[#allocation8 + $0xc] sm:$0xf]
    %v798 = vld [vmem:[#allocation8 + $0x10] sm:$0xf]
    %v799 = vld [vmem:[#allocation8 + $0x14] sm:$0xf]
    %v800 = vld [vmem:[#allocation8 + $0x18] sm:$0xf]
    %v801 = vld [vmem:[#allocation8 + $0x1c] sm:$0xf]
    %v802 = vld [vmem:[#allocation8 + $0x20] sm:$0xf]
    %v803 = vld [vmem:[#allocation8 + $0x24] sm:$0xf]
    %v804 = vld [vmem:[#allocation8 + $0x28] sm:$0xf]
    %v805 = vld [vmem:[#allocation8 + $0x2c] sm:$0xf]
    %v806 = vld [vmem:[#allocation8 + $0x30] sm:$0xf]
    %v807 = vld [vmem:[#allocation8 + $0x34] sm:$0xf]
    %v808 = vld [vmem:[#allocation8 + $0x38] sm:$0xf]
    %v809 = vld [vmem:[#allocation8 + $0x3c] sm:$0xf]
    %v810 = vld [vmem:[#allocation8 + $0x40] sm:$0xf]
    %v811 = vld [vmem:[#allocation8 + $0x44] sm:$0xf]
    %v812 = vld [vmem:[#allocation8 + $0x48] sm:$0xf]
    %v813 = vld [vmem:[#allocation8 + $0x4c] sm:$0xf]
    %v814 = vld [vmem:[#allocation8 + $0x50] sm:$0xf]
    %v815 = vld [vmem:[#allocation8 + $0x54] sm:$0xf]
    %v816 = vld [vmem:[#allocation8 + $0x58] sm:$0xf]
    %v817 = vld [vmem:[#allocation8 + $0x5c] sm:$0xf]
    %v818 = vld [vmem:[#allocation8 + $0x60] sm:$0xf]
    %v819 = vld [vmem:[#allocation8 + $0x64] sm:$0xf]
    %v820 = vld [vmem:[#allocation8 + $0x68] sm:$0xf]
    %v821 = vld [vmem:[#allocation8 + $0x6c] sm:$0xf]
    %v822 = vld [vmem:[#allocation8 + $0x70] sm:$0xf]
    %v823 = vld [vmem:[#allocation8 + $0x74] sm:$0xf]
    %v824 = vld [vmem:[#allocation8 + $0x78] sm:$0xf]
    %v825 = vld [vmem:[#allocation8 + $0x7c] sm:$0xf]
    %v826 = vld [vmem:[%s17] sm:$0x1]
    %v828 = vperm.slane %v826, 0
    %v862 = vunpack.c.l.b16 %v794
    %v863 = vunpack.c.l.b16 %v795
    %v864 = vunpack.c.l.b16 %v796
    %v865 = vunpack.c.l.b16 %v797
    %v866 = vunpack.c.l.b16 %v798
    %v867 = vunpack.c.l.b16 %v799
    %v868 = vunpack.c.l.b16 %v800
    %v869 = vunpack.c.l.b16 %v801
    %v870 = vunpack.c.l.b16 %v802
    %v871 = vunpack.c.l.b16 %v803
    %v872 = vunpack.c.l.b16 %v804
    %v873 = vunpack.c.l.b16 %v805
    %v874 = vunpack.c.l.b16 %v806
    %v875 = vunpack.c.l.b16 %v807
    %v876 = vunpack.c.l.b16 %v808
    %v877 = vunpack.c.l.b16 %v809
    %v878 = vunpack.c.l.b16 %v810
    %v879 = vunpack.c.l.b16 %v811
    %v880 = vunpack.c.l.b16 %v812
    %v881 = vunpack.c.l.b16 %v813
    %v882 = vunpack.c.l.b16 %v814
    %v883 = vunpack.c.l.b16 %v815
    %v884 = vunpack.c.l.b16 %v816
    %v885 = vunpack.c.l.b16 %v817
    %v886 = vunpack.c.l.b16 %v818
    %v887 = vunpack.c.l.b16 %v819
    %v888 = vunpack.c.l.b16 %v820
    %v889 = vunpack.c.l.b16 %v821
    %v890 = vunpack.c.l.b16 %v822
    %v891 = vunpack.c.l.b16 %v823
    %v892 = vunpack.c.l.b16 %v824
    %v893 = vunpack.c.l.b16 %v825
    %v894 = vpack.c.b16 %v863, %v862
    %v895 = vpack.c.b16 %v865, %v864
    %v896 = vpack.c.b16 %v867, %v866
    %v897 = vpack.c.b16 %v869, %v868
    %v898 = vpack.c.b16 %v871, %v870
    %v899 = vpack.c.b16 %v873, %v872
    %v900 = vpack.c.b16 %v875, %v874
    %v901 = vpack.c.b16 %v877, %v876
    %v902 = vpack.c.b16 %v879, %v878
    %v903 = vpack.c.b16 %v881, %v880
    %v904 = vpack.c.b16 %v883, %v882
    %v905 = vpack.c.b16 %v885, %v884
    %v906 = vpack.c.b16 %v887, %v886
    %v907 = vpack.c.b16 %v889, %v888
    %v908 = vpack.c.b16 %v891, %v890
    %v909 = vpack.c.b16 %v893, %v892
    %926 = vmatpush.bf16.msra.mxu0 %v901
    %927 = vmatpush.bf16.msra.mxu0 %v900
    %928 = vmatpush.bf16.msra.mxu0 %v899
    %929 = vmatpush.bf16.msra.mxu0 %v898
    %930 = vmatpush.bf16.msra.mxu0 %v897
    %931 = vmatpush.bf16.msra.mxu0 %v896
    %932 = vmatpush.bf16.msra.mxu0 %v895
    %933 = vmatpush.bf16.msra.mxu0 %v894
    %934 = vmatmul.bf16.gmra.mxu0 %v792
    %v935 = vpop.f32.mrf.mxu0
    %v936 = vadd.f32 %v828, %v935
    %v937 = vpop.f32.mrf.mxu0
    %938 = vdwg.mxu0
    %939 = vmatpush.bf16.msra.mxu0 %v909
    %940 = vmatpush.bf16.msra.mxu0 %v908
    %941 = vmatpush.bf16.msra.mxu0 %v907
    %942 = vmatpush.bf16.msra.mxu0 %v906
    %943 = vmatpush.bf16.msra.mxu0 %v905
    %944 = vmatpush.bf16.msra.mxu0 %v904
    %945 = vmatpush.bf16.msra.mxu0 %v903
    %946 = vmatpush.bf16.msra.mxu0 %v902
    %947 = vmatmul.bf16.gmra.mxu0 %v793
    %v948 = vpop.f32.mrf.mxu0
    %v949 = vadd.f32 %v936, %v948
    %v950 = vpop.f32.mrf.mxu0
    %951 = vdwg.mxu0
    %v952 = vpack.c.bf16 %v949, %v949
    %953 = vst [vmem:[#allocation10] sm:$0xf] %v952
    // Predicated region
    $region90: #{tpu_custom_call.1} parent=1 // pred_check
      _
    $region91: #{tpu_custom_call.1} parent=1 // pred_check_branch
      %955 = sbr.rel (0) target = $region93
    $region92: #{tpu_custom_call.1} parent=1 // pred_region
      %957 = vsyncadd [#allocation4], 0
      %s959 = sshll.u32 [#allocation10], 4
      %s960 = int_to_ptr.vmem [resolvable:$true] %s959
      %s961 = sshll.u32 %s18, 4
      %s962 = int_to_ptr.hbm [resolvable:$true] %s961
      %964 = dma.vmem_to_hbm [thread:$0]  %s960, 64, %s962, [#allocation4]
    $region93: #{tpu_custom_call.1} parent=1 // pred_fallthru
      _
    // Predicated region
    $region94: #{tpu_custom_call.1} parent=1 // pred_check
      _
    $region95: #{tpu_custom_call.1} parent=1 // pred_check_branch
      %966 = sbr.rel (0) target = $region97
    $region96: #{tpu_custom_call.1} parent=1 // pred_region
      %968 = vsyncadd [#allocation12], 0
      %s970 = sshll.u32 [#allocation11], 4
      %s971 = int_to_ptr.vmem [resolvable:$true] %s970
      %s972 = sshll.u32 %s19, 4
      %s973 = int_to_ptr.hbm [resolvable:$true] %s972
      %975 = dma.vmem_to_hbm [thread:$0]  %s971, 128, %s973, [#allocation12]
    $region97: #{tpu_custom_call.1} parent=1 // pred_fallthru
      _
    // Predicated region
    $region98: #{tpu_custom_call.1} parent=1 // pred_check
      _
    $region99: #{tpu_custom_call.1} parent=1 // pred_check_branch
      %977 = sbr.rel (0) target = $region101
    $region100: #{tpu_custom_call.1} parent=1 // pred_region
      %979 = dma.done [#allocation4], 64
    $region101: #{tpu_custom_call.1} parent=1 // pred_fallthru
      _
    // Predicated region
    $region102: #{tpu_custom_call.1} parent=1 // pred_check
      _
    $region103: #{tpu_custom_call.1} parent=1 // pred_check_branch
      %981 = sbr.rel (0) target = $region105
    $region104: #{tpu_custom_call.1} parent=1 // pred_region
      %983 = dma.done [#allocation12], 128
    $region105: #{tpu_custom_call.1} parent=1 // pred_fallthru
      _
    %984 = vsyncpa [#allocation3], 1
    %985 = vsyncpa [#allocation6], 1
    %986 = vsyncpa [#allocation9], 1
    %987 = vsyncpa [#allocation4], 1
    %988 = vsyncpa [#allocation12], 1

</llo_original>
